<compile_context>
chip_gen: v7x
topology: tpu7x:2x2x1
jax: 0.10.0
libtpu: 0.0.40
codegen_flags: <defaults>
</compile_context>

<pallas_src>
import functools

import jax
import jax.numpy as jnp
from jax.experimental import pallas as pl
from jax.experimental.pallas import tpu as pltpu


def _round_up(x, m):
    return (x + m - 1) // m * m


def _pad2(a, rows, cols):
    """Zero-pad a 2-D array up to (rows, cols); no-op if already that shape."""
    r, c = a.shape
    if r == rows and c == cols:
        return a
    return jnp.pad(a, ((0, rows - r), (0, cols - c)))


def _resnet_block_fc_kernel(has_shortcut, x_ref, w0_ref, b0_ref, w1_ref,
                            b1_ref, *rest):
    # x_ref:  (tm, in_p)      f32
    # w0_ref: (in_p, h_p)     matmul dtype   b0_ref: (1, h_p)   f32
    # w1_ref: (h_p, out_p)    matmul dtype   b1_ref: (1, out_p) f32
    # ws_ref: (in_p, out_p)   matmul dtype   (only when has_shortcut)
    # o_ref:  (tm, out_p)     f32
    if has_shortcut:
        ws_ref, o_ref = rest
    else:
        (o_ref,) = rest

    x = x_ref[...]                                           # f32

    # relu / bias / residual math in f32; only MXU operands are down-cast.
    h = jnp.maximum(x, 0.0).astype(w0_ref.dtype)
    net = jnp.dot(h, w0_ref[...],
                  preferred_element_type=jnp.float32) + b0_ref[...]

    dh = jnp.maximum(net, 0.0).astype(w1_ref.dtype)
    dx = jnp.dot(dh, w1_ref[...],
                 preferred_element_type=jnp.float32) + b1_ref[...]

    if has_shortcut:
        x_s = jnp.dot(x.astype(ws_ref.dtype), ws_ref[...],
                      preferred_element_type=jnp.float32)
    else:
        x_s = x                                              # size_in == size_out

    o_ref[...] = (x_s + dx).astype(o_ref.dtype)


def resnet_block_fc(x, params, *, tm=512, matmul_dtype=jnp.bfloat16):
    """x: [N, size_in] float32. params: dict of transposed f32 weights/biases."""
    w0t, b0, w1t, b1, wst = (params["w0t"], params["b0"], params["w1t"],
                             params["b1"], params["wst"])
    n, size_in = x.shape
    size_h = w0t.shape[1]
    size_out = w1t.shape[1]
    has_shortcut = wst is not None
    assert has_shortcut or size_in == size_out

    # Lane-dense padding targets for feature dims (multiples of 128).
    in_p = _round_up(size_in, 128)
    h_p = _round_up(size_h, 128)
    out_p = _round_up(size_out, 128)

    w_bytes = jnp.dtype(matmul_dtype).itemsize
    weight_bytes = (in_p * h_p + h_p * out_p) * w_bytes + (h_p + out_p) * 4
    if has_shortcut:
        weight_bytes += in_p * out_p * w_bytes

    # Row tile: as large as requested, but (a) don't over-pad tiny inputs and
    # (b) keep double-buffered x/out tiles + (double-buffered) weights within
    # a conservative VMEM budget (48 MiB, valid on v5e/v6e/v7x).
    vmem_budget = 48 * 1024 * 1024
    row_bytes = 2 * (in_p + out_p) * 4            # double-buffered x + out rows
    tm_cap = max(8, ((vmem_budget - 2 * weight_bytes) // row_bytes) // 8 * 8)
    tm = int(max(8, min(tm, tm_cap, _round_up(n, 8))))
    n_p = _round_up(n, tm)

    f32 = jnp.float32
    xp = _pad2(x.astype(f32), n_p, in_p)
    w0p = _pad2(w0t.astype(matmul_dtype), in_p, h_p)
    b0p = _pad2(b0.astype(f32), 1, h_p)
    w1p = _pad2(w1t.astype(matmul_dtype), h_p, out_p)
    b1p = _pad2(b1.astype(f32), 1, out_p)

    args = [xp, w0p, b0p, w1p, b1p]
    in_specs = [
        pl.BlockSpec((tm, in_p), lambda i: (i, 0)),        # x tile
        pl.BlockSpec((in_p, h_p), lambda i: (0, 0)),       # W0^T (grid-invariant)
        pl.BlockSpec((1, h_p), lambda i: (0, 0)),          # b0
        pl.BlockSpec((h_p, out_p), lambda i: (0, 0)),      # W1^T
        pl.BlockSpec((1, out_p), lambda i: (0, 0)),        # b1
    ]

    flops = 2 * n_p * (in_p * h_p + h_p * out_p)
    bytes_accessed = (n_p * in_p * 4 + n_p * out_p * 4 + weight_bytes)

    if has_shortcut:
        wsp = _pad2(wst.astype(matmul_dtype), in_p, out_p)
        args.append(wsp)
        in_specs.append(pl.BlockSpec((in_p, out_p), lambda i: (0, 0)))
        flops += 2 * n_p * in_p * out_p

    # VMEM request: double-buffered x/out tiles + double-buffered weights,
    # with 2x headroom, clamped to [32, 64] MiB (valid on v7x's 64 MiB VMEM).
    vmem_needed = tm * row_bytes + 2 * weight_bytes
    vmem_limit = int(min(max(2 * vmem_needed, 32 * 1024 * 1024),
                         64 * 1024 * 1024))

    kernel = functools.partial(_resnet_block_fc_kernel, has_shortcut)

    out_padded = pl.pallas_call(
        kernel,
        out_shape=jax.ShapeDtypeStruct((n_p, out_p), jnp.float32),
        grid_spec=pltpu.PrefetchScalarGridSpec(
            num_scalar_prefetch=0,
            grid=(n_p // tm,),
            in_specs=in_specs,
            out_specs=pl.BlockSpec((tm, out_p), lambda i: (i, 0)),
        ),
        compiler_params=pltpu.CompilerParams(
            dimension_semantics=("parallel",),
            vmem_limit_bytes=vmem_limit),
        cost_estimate=pl.CostEstimate(
            flops=flops, transcendentals=0, bytes_accessed=bytes_accessed),
    )(*args)

    if n_p == n and out_p == size_out:
        return out_padded
    return out_padded[:n, :size_out]


def init_params(key, size_in, size_out=None, size_h=None):
    """Deterministic parameter init mirroring the PyTorch module's shapes.

    nn.Linear default init ~ U(-1/sqrt(fan_in), 1/sqrt(fan_in)); fc_1.weight
    is zero-initialized exactly as in the module's __init__.
    """
    if size_out is None:
        size_out = size_in
    if size_h is None:
        size_h = min(size_in, size_out)

    k0, k1, k2, k3 = jax.random.split(key, 4)

    def uni(k, shape, fan_in):
        bound = 1.0 / jnp.sqrt(fan_in)
        return jax.random.uniform(k, shape, jnp.float32, -bound, bound)

    # PyTorch stores Linear weight as (out, in); we keep the transposed form
    # (in, out) so the kernel does x @ W^T directly.
    w0t = uni(k0, (size_in, size_h), size_in)
    b0 = uni(k1, (1, size_h), size_in)
    w1t = jnp.zeros((size_h, size_out), jnp.float32)  # nn.init.zeros_(fc_1.weight)
    b1 = uni(k2, (1, size_out), size_h)
    if size_in == size_out:
        wst = None
    else:
        wst = uni(k3, (size_in, size_out), size_in)
    return {"w0t": w0t, "b0": b0, "w1t": w1t, "b1": b1, "wst": wst}


def reference(x, params):
    h = jnp.maximum(x, 0.0)
    net = h @ params["w0t"] + params["b0"]
    dx = jnp.maximum(net, 0.0) @ params["w1t"] + params["b1"]
    x_s = x @ params["wst"] if params["wst"] is not None else x
    return x_s + dx


if __name__ == "__main__":
    key = jax.random.PRNGKey(0)
    kx, kp = jax.random.split(key)

    batch, seq = 2, 8
    size_in, size_out = 32, 64                 # shortcut path exercised

    x3 = jax.random.normal(kx, (batch, seq, size_in), jnp.float32)
    x = x3.reshape(batch * seq, size_in)       # glue: flatten leading dims

    params = init_params(kp, size_in, size_out)
    ref = reference(x, params)

    # bf16-matmul (default, fast) path — loose tolerance vs. the f32 reference.
    out = jax.block_until_ready(resnet_block_fc(x, params))
    assert out.shape == (batch * seq, size_out)
    assert jnp.allclose(out, ref, rtol=5e-2, atol=5e-2), "bf16 path mismatch"

    # f32-matmul path — tight tolerance.
    out_f32 = jax.block_until_ready(
        resnet_block_fc(x, params, matmul_dtype=jnp.float32))
    assert jnp.allclose(out_f32, ref, rtol=1e-5, atol=1e-5), "f32 path mismatch"

    # Identity-shortcut branch (size_in == size_out): no shortcut weight is
    # DMA'd, and fc_1.weight == 0 makes this exact even with bf16 matmuls.
    params_id = init_params(kp, size_in)       # size_out defaults to size_in
    out_id = jax.block_until_ready(resnet_block_fc(x, params_id))
    assert jnp.allclose(out_id, reference(x, params_id), rtol=1e-5, atol=1e-5)

    print("KERNEL_OK")
</pallas_src>

<mosaic_0001>
module attributes {stable_mosaic.version = 11 : i64} {
  func.func @_resnet_block_fc_kernel(%arg0: i32, %arg1: memref<16x128xf32, #tpu.memory_space<vmem>>, %arg2: memref<128x128xbf16, #tpu.memory_space<vmem>>, %arg3: memref<1x128xf32, #tpu.memory_space<vmem>>, %arg4: memref<128x128xbf16, #tpu.memory_space<vmem>>, %arg5: memref<1x128xf32, #tpu.memory_space<vmem>>, %arg6: memref<128x128xbf16, #tpu.memory_space<vmem>>, %arg7: memref<16x128xf32, #tpu.memory_space<vmem>>) attributes {dimension_semantics = [#tpu.dimension_semantics<parallel>], iteration_bounds = array<i64: 1>, scalar_prefetch = 0 : i64, scratch_operands = 0 : i64, tpu.core_type = #tpu.core_type<tc>, window_params = [{transform_indices = @transform_0, window_bounds = array<i64: 16, 128>}, {pipeline_mode = #tpu.pipeline_mode<synchronous>, transform_indices = @transform_1, window_bounds = array<i64: 128, 128>}, {pipeline_mode = #tpu.pipeline_mode<synchronous>, transform_indices = @transform_2, window_bounds = array<i64: 1, 128>}, {pipeline_mode = #tpu.pipeline_mode<synchronous>, transform_indices = @transform_3, window_bounds = array<i64: 128, 128>}, {pipeline_mode = #tpu.pipeline_mode<synchronous>, transform_indices = @transform_4, window_bounds = array<i64: 1, 128>}, {pipeline_mode = #tpu.pipeline_mode<synchronous>, transform_indices = @transform_5, window_bounds = array<i64: 128, 128>}, {transform_indices = @transform_6, window_bounds = array<i64: 16, 128>}]} {
    %c0 = arith.constant 0 : index
    %c0_0 = arith.constant 0 : index
    %0 = vector.load %arg1[%c0, %c0_0] : memref<16x128xf32, #tpu.memory_space<vmem>>, vector<16x128xf32>
    %cst = arith.constant 0.000000e+00 : f32
    %1 = vector.broadcast %cst : f32 to vector<16x128xf32>
    %2 = arith.maximumf %0, %1 : vector<16x128xf32>
    %3 = arith.truncf %2 : vector<16x128xf32> to vector<16x128xbf16>
    %c0_1 = arith.constant 0 : index
    %c0_2 = arith.constant 0 : index
    %4 = vector.load %arg2[%c0_1, %c0_2] : memref<128x128xbf16, #tpu.memory_space<vmem>>, vector<128x128xbf16>
    %cst_3 = arith.constant dense<0.000000e+00> : vector<16x128xf32>
    %5 = tpu.matmul %3, %4, %cst_3 {dimension_numbers = #tpu.dot_dimension_numbers<[1], [0], [0], [1], [0, 0, 1, 1], [], []>} : vector<16x128xbf16>, vector<128x128xbf16>, vector<16x128xf32> -> vector<16x128xf32>
    %c0_4 = arith.constant 0 : index
    %c0_5 = arith.constant 0 : index
    %6 = vector.load %arg3[%c0_4, %c0_5] : memref<1x128xf32, #tpu.memory_space<vmem>>, vector<1x128xf32>
    %7 = vector.broadcast %6 : vector<1x128xf32> to vector<16x128xf32>
    %8 = arith.addf %5, %7 : vector<16x128xf32>
    %cst_6 = arith.constant 0.000000e+00 : f32
    %9 = vector.broadcast %cst_6 : f32 to vector<16x128xf32>
    %10 = arith.maximumf %8, %9 : vector<16x128xf32>
    %11 = arith.truncf %10 : vector<16x128xf32> to vector<16x128xbf16>
    %c0_7 = arith.constant 0 : index
    %c0_8 = arith.constant 0 : index
    %12 = vector.load %arg4[%c0_7, %c0_8] : memref<128x128xbf16, #tpu.memory_space<vmem>>, vector<128x128xbf16>
    %cst_9 = arith.constant dense<0.000000e+00> : vector<16x128xf32>
    %13 = tpu.matmul %11, %12, %cst_9 {dimension_numbers = #tpu.dot_dimension_numbers<[1], [0], [0], [1], [0, 0, 1, 1], [], []>} : vector<16x128xbf16>, vector<128x128xbf16>, vector<16x128xf32> -> vector<16x128xf32>
    %c0_10 = arith.constant 0 : index
    %c0_11 = arith.constant 0 : index
    %14 = vector.load %arg5[%c0_10, %c0_11] : memref<1x128xf32, #tpu.memory_space<vmem>>, vector<1x128xf32>
    %15 = vector.broadcast %14 : vector<1x128xf32> to vector<16x128xf32>
    %16 = arith.addf %13, %15 : vector<16x128xf32>
    %17 = arith.truncf %0 : vector<16x128xf32> to vector<16x128xbf16>
    %c0_12 = arith.constant 0 : index
    %c0_13 = arith.constant 0 : index
    %18 = vector.load %arg6[%c0_12, %c0_13] : memref<128x128xbf16, #tpu.memory_space<vmem>>, vector<128x128xbf16>
    %cst_14 = arith.constant dense<0.000000e+00> : vector<16x128xf32>
    %19 = tpu.matmul %17, %18, %cst_14 {dimension_numbers = #tpu.dot_dimension_numbers<[1], [0], [0], [1], [0, 0, 1, 1], [], []>} : vector<16x128xbf16>, vector<128x128xbf16>, vector<16x128xf32> -> vector<16x128xf32>
    %20 = arith.addf %19, %16 : vector<16x128xf32>
    %c0_15 = arith.constant 0 : index
    %c0_16 = arith.constant 0 : index
    %21 = vector.load %arg7[%c0_15, %c0_16] : memref<16x128xf32, #tpu.memory_space<vmem>>, vector<16x128xf32>
    tpu.vector_store %arg7[%c0_15, %c0_16], %20 {strides = array<i32>} : memref<16x128xf32, #tpu.memory_space<vmem>>, vector<16x128xf32>,
    return
  }
  func.func @transform_0(%arg0: i32) -> (i32, i32) {
    %c0_i32 = arith.constant 0 : i32
    %c0_i32_0 = arith.constant 0 : i32
    return %arg0, %c0_i32 : i32, i32
  }
  func.func @transform_1(%arg0: i32) -> (i32, i32) {
    %c0_i32 = arith.constant 0 : i32
    %c0_i32_0 = arith.constant 0 : i32
    %c0_i32_1 = arith.constant 0 : i32
    return %c0_i32, %c0_i32_0 : i32, i32
  }
  func.func @transform_2(%arg0: i32) -> (i32, i32) {
    %c0_i32 = arith.constant 0 : i32
    %c0_i32_0 = arith.constant 0 : i32
    %c0_i32_1 = arith.constant 0 : i32
    return %c0_i32, %c0_i32_0 : i32, i32
  }
  func.func @transform_3(%arg0: i32) -> (i32, i32) {
    %c0_i32 = arith.constant 0 : i32
    %c0_i32_0 = arith.constant 0 : i32
    %c0_i32_1 = arith.constant 0 : i32
    return %c0_i32, %c0_i32_0 : i32, i32
  }
  func.func @transform_4(%arg0: i32) -> (i32, i32) {
    %c0_i32 = arith.constant 0 : i32
    %c0_i32_0 = arith.constant 0 : i32
    %c0_i32_1 = arith.constant 0 : i32
    return %c0_i32, %c0_i32_0 : i32, i32
  }
  func.func @transform_5(%arg0: i32) -> (i32, i32) {
    %c0_i32 = arith.constant 0 : i32
    %c0_i32_0 = arith.constant 0 : i32
    %c0_i32_1 = arith.constant 0 : i32
    return %c0_i32, %c0_i32_0 : i32, i32
  }
  func.func @transform_6(%arg0: i32) -> (i32, i32) {
    %c0_i32 = arith.constant 0 : i32
    %c0_i32_0 = arith.constant 0 : i32
    return %arg0, %c0_i32 : i32, i32
  }
}

</mosaic_0001>

<llo_original>
// kernel: tpu_custom_call.1
$region0: #{tpu_custom_call.1}
  #allocation0 [shape = 'u32[]', space=smem, size = 0x4, offset = 0x4, fixed_abs, tag = 'smem constant byte address 0x4 - core index']
  #allocation1 [shape = 'u32[144,128]{1,0:T(1,128)}', space=vmem, size = 0x12000, scoped, tag = 'internal scratch']
  %s0 = inlined_call_operand.hbm [shape: f32[16,128], index: 0, kind: input, shape index: {}]
  %s1 = inlined_call_operand.hbm [shape: bf16[128,128], index: 1, kind: input, shape index: {}]
  %s2 = inlined_call_operand.vmem [shape: f32[1,128], index: 2, kind: input, shape index: {}]
  %s3 = inlined_call_operand.hbm [shape: bf16[128,128], index: 3, kind: input, shape index: {}]
  %s4 = inlined_call_operand.vmem [shape: f32[1,128], index: 4, kind: input, shape index: {}]
  %s5 = inlined_call_operand.hbm [shape: bf16[128,128], index: 5, kind: input, shape index: {}]
  %s6 = inlined_call_operand.hbm [shape: f32[16,128], index: 6, kind: output, shape index: {}]
  %s7 = sld [smem:[#allocation0]]
  $region50: #{tpu_custom_call.1} parent=0
    _
  %s9 = ssub.s32 1, %s7
  %s10 = scalar_select 0, %s9, %s7
  $region1: #{tpu_custom_call.1} parent=0
    #allocation2 [shape = 'u8[8192]{0}', space=vmem, size = 0x2000, scoped, tag = 'input window, operand 0, single buffered']
    #allocation3 [shape = 's32[1]{0}', space=sflag, size = 0x4, scoped, tag = 'scoped memory for tpu_custom_call.1']
    #allocation4 [shape = 's32[1]{0}', space=sflag, size = 0x4, scoped, tag = 'scoped memory for tpu_custom_call.1']
    #allocation5 [shape = 'u8[32768]{0}', space=vmem, size = 0x8000, scoped, tag = 'input window, operand 1, single buffered']
    #allocation6 [shape = 's32[1]{0}', space=sflag, size = 0x4, scoped, tag = 'scoped memory for tpu_custom_call.1']
    #allocation7 [shape = 'u8[32768]{0}', space=vmem, size = 0x8000, scoped, tag = 'input window, operand 3, single buffered']
    #allocation8 [shape = 'u8[32768]{0}', space=vmem, size = 0x8000, scoped, tag = 'input window, operand 5, single buffered']
    #allocation9 [shape = 's32[1]{0}', space=sflag, size = 0x4, scoped, tag = 'scoped memory for tpu_custom_call.1']
    #allocation10 [shape = 'u8[8192]{0}', space=vmem, size = 0x2000, scoped, tag = 'output window, operand 0, single buffered']
    %11 = vsyncpa [#allocation3], 0
    %12 = vsyncpa [#allocation6], 0
    %13 = vsyncpa [#allocation9], 0
    %14 = vsyncpa [#allocation4], 0
    // Predicated region
    $region2: #{tpu_custom_call.1} parent=1 // pred_check
      _
    $region3: #{tpu_custom_call.1} parent=1 // pred_check_branch
      %16 = sbr.rel (0) target = $region5
    $region4: #{tpu_custom_call.1} parent=1 // pred_region
      %s18 = ssub.s32 256, 256
      %19 = vsyncadd [#allocation3], %s18
      %s20 = sshll.u32 [#allocation2], 4
      %s21 = int_to_ptr.vmem [resolvable:$true] %s20
      %26 = dma.hbm_to_vmem [thread:$0]  %s0, 256, %s21, [#allocation3], 128, 128, 8
    $region5: #{tpu_custom_call.1} parent=1 // pred_fallthru
      _
    // Predicated region
    $region6: #{tpu_custom_call.1} parent=1 // pred_check
      _
    $region7: #{tpu_custom_call.1} parent=1 // pred_check_branch
      %28 = sbr.rel (0) target = $region9
    $region8: #{tpu_custom_call.1} parent=1 // pred_region
      %s30 = ssub.s32 1024, 1024
      %31 = vsyncadd [#allocation6], %s30
      %s32 = sshll.u32 [#allocation5], 4
      %s33 = int_to_ptr.vmem [resolvable:$true] %s32
      %38 = dma.hbm_to_vmem [thread:$0]  %s1, 1024, %s33, [#allocation6], 64, 64, 4
    $region9: #{tpu_custom_call.1} parent=1 // pred_fallthru
      _
    // Predicated region
    $region10: #{tpu_custom_call.1} parent=1 // pred_check
      _
    $region11: #{tpu_custom_call.1} parent=1 // pred_check_branch
      %40 = sbr.rel (0) target = $region13
    $region12: #{tpu_custom_call.1} parent=1 // pred_region
      _
    $region13: #{tpu_custom_call.1} parent=1 // pred_fallthru
      _
    // Predicated region
    $region14: #{tpu_custom_call.1} parent=1 // pred_check
      _
    $region15: #{tpu_custom_call.1} parent=1 // pred_check_branch
      %42 = sbr.rel (0) target = $region17
    $region16: #{tpu_custom_call.1} parent=1 // pred_region
      %s44 = ssub.s32 1024, 1024
      %45 = vsyncadd [#allocation6], %s44
      %s46 = sshll.u32 [#allocation7], 4
      %s47 = int_to_ptr.vmem [resolvable:$true] %s46
      %52 = dma.hbm_to_vmem [thread:$0]  %s3, 1024, %s47, [#allocation6], 64, 64, 4
    $region17: #{tpu_custom_call.1} parent=1 // pred_fallthru
      _
    // Predicated region
    $region18: #{tpu_custom_call.1} parent=1 // pred_check
      _
    $region19: #{tpu_custom_call.1} parent=1 // pred_check_branch
      %54 = sbr.rel (0) target = $region21
    $region20: #{tpu_custom_call.1} parent=1 // pred_region
      _
    $region21: #{tpu_custom_call.1} parent=1 // pred_fallthru
      _
    // Predicated region
    $region22: #{tpu_custom_call.1} parent=1 // pred_check
      _
    $region23: #{tpu_custom_call.1} parent=1 // pred_check_branch
      %56 = sbr.rel (0) target = $region25
    $region24: #{tpu_custom_call.1} parent=1 // pred_region
      %s58 = ssub.s32 1024, 1024
      %59 = vsyncadd [#allocation9], %s58
      %s60 = sshll.u32 [#allocation8], 4
      %s61 = int_to_ptr.vmem [resolvable:$true] %s60
      %66 = dma.hbm_to_vmem [thread:$0]  %s5, 1024, %s61, [#allocation9], 64, 64, 4
    $region25: #{tpu_custom_call.1} parent=1 // pred_fallthru
      _
    // Predicated region
    $region26: #{tpu_custom_call.1} parent=1 // pred_check
      _
    $region27: #{tpu_custom_call.1} parent=1 // pred_check_branch
      %68 = sbr.rel (0) target = $region29
    $region28: #{tpu_custom_call.1} parent=1 // pred_region
      %69 = dma.done [#allocation3], 256
    $region29: #{tpu_custom_call.1} parent=1 // pred_fallthru
      _
    // Predicated region
    $region30: #{tpu_custom_call.1} parent=1 // pred_check
      _
    $region31: #{tpu_custom_call.1} parent=1 // pred_check_branch
      %71 = sbr.rel (0) target = $region33
    $region32: #{tpu_custom_call.1} parent=1 // pred_region
      %72 = dma.done [#allocation6], 1024
    $region33: #{tpu_custom_call.1} parent=1 // pred_fallthru
      _
    // Predicated region
    $region34: #{tpu_custom_call.1} parent=1 // pred_check
      _
    $region35: #{tpu_custom_call.1} parent=1 // pred_check_branch
      %74 = sbr.rel (0) target = $region37
    $region36: #{tpu_custom_call.1} parent=1 // pred_region
      %75 = dma.done [#allocation6], 1024
    $region37: #{tpu_custom_call.1} parent=1 // pred_fallthru
      _
    // Predicated region
    $region38: #{tpu_custom_call.1} parent=1 // pred_check
      _
    $region39: #{tpu_custom_call.1} parent=1 // pred_check_branch
      %77 = sbr.rel (0) target = $region41
    $region40: #{tpu_custom_call.1} parent=1 // pred_region
      %78 = dma.done [#allocation9], 1024
    $region41: #{tpu_custom_call.1} parent=1 // pred_fallthru
      _
    %v80 = vld [vmem:[#allocation2] sm:$0xff]
    %v81 = vld [vmem:[#allocation2 + $0x8] sm:$0xff]
    %v82 = vmax.f32 %v80, 0.0
    %v83 = vmax.f32 %v81, 0.0
    %v84 = vpack.c.bf16 %v83, %v82
    %v85 = vld [vmem:[#allocation5] sm:$0xf]
    %v86 = vld [vmem:[#allocation5 + $0x4] sm:$0xf]
    %v87 = vld [vmem:[#allocation5 + $0x8] sm:$0xf]
    %v88 = vld [vmem:[#allocation5 + $0xc] sm:$0xf]
    %v89 = vld [vmem:[#allocation5 + $0x10] sm:$0xf]
    %v90 = vld [vmem:[#allocation5 + $0x14] sm:$0xf]
    %v91 = vld [vmem:[#allocation5 + $0x18] sm:$0xf]
    %v92 = vld [vmem:[#allocation5 + $0x1c] sm:$0xf]
    %v93 = vld [vmem:[#allocation5 + $0x20] sm:$0xf]
    %v94 = vld [vmem:[#allocation5 + $0x24] sm:$0xf]
    %v95 = vld [vmem:[#allocation5 + $0x28] sm:$0xf]
    %v96 = vld [vmem:[#allocation5 + $0x2c] sm:$0xf]
    %v97 = vld [vmem:[#allocation5 + $0x30] sm:$0xf]
    %v98 = vld [vmem:[#allocation5 + $0x34] sm:$0xf]
    %v99 = vld [vmem:[#allocation5 + $0x38] sm:$0xf]
    %v100 = vld [vmem:[#allocation5 + $0x3c] sm:$0xf]
    %v101 = vld [vmem:[%s2] sm:$0x1]
    %v103 = vlaneseq
    %v104 = vshrl.u32 %v103, 7
    %v105 = vsub.s32 0, %v104
    %v106 = vrot.slane %v101, %v105
    %v124 = vunpack.c.l.b16 %v85
    %v125 = vunpack.c.l.b16 %v86
    %v126 = vunpack.c.l.b16 %v87
    %v127 = vunpack.c.l.b16 %v88
    %v128 = vunpack.c.l.b16 %v89
    %v129 = vunpack.c.l.b16 %v90
    %v130 = vunpack.c.l.b16 %v91
    %v131 = vunpack.c.l.b16 %v92
    %v132 = vunpack.c.l.b16 %v93
    %v133 = vunpack.c.l.b16 %v94
    %v134 = vunpack.c.l.b16 %v95
    %v135 = vunpack.c.l.b16 %v96
    %v136 = vunpack.c.l.b16 %v97
    %v137 = vunpack.c.l.b16 %v98
    %v138 = vunpack.c.l.b16 %v99
    %v139 = vunpack.c.l.b16 %v100
    %v140 = vpack.c.b16 %v125, %v124
    %v141 = vpack.c.b16 %v127, %v126
    %v142 = vpack.c.b16 %v129, %v128
    %v143 = vpack.c.b16 %v131, %v130
    %v144 = vpack.c.b16 %v133, %v132
    %v145 = vpack.c.b16 %v135, %v134
    %v146 = vpack.c.b16 %v137, %v136
    %v147 = vpack.c.b16 %v139, %v138
    %156 = vmatprep.subr.bf16.mxu0 0
    %157 = vmatpush1.bf16.msra.mxu0 %v140
    %158 = vmatprep.subr.bf16.mxu0 0
    %159 = vmatpush1.bf16.msra.mxu0 %v141
    %160 = vmatprep.subr.bf16.mxu0 0
    %161 = vmatpush1.bf16.msra.mxu0 %v142
    %162 = vmatprep.subr.bf16.mxu0 0
    %163 = vmatpush1.bf16.msra.mxu0 %v143
    %164 = vmatprep.subr.bf16.mxu0 0
    %165 = vmatpush1.bf16.msra.mxu0 %v144
    %166 = vmatprep.subr.bf16.mxu0 0
    %167 = vmatpush1.bf16.msra.mxu0 %v145
    %168 = vmatprep.subr.bf16.mxu0 0
    %169 = vmatpush1.bf16.msra.mxu0 %v146
    %170 = vmatprep.subr.bf16.mxu0 0
    %171 = vmatpush1.bf16.msra.mxu0 %v147
    %172 = vmatprep.subr.bf16.mxu0 0
    %173 = vmatpush1.bf16.msra.mxu0 0
    %174 = vmatprep.subr.bf16.mxu0 0
    %175 = vmatpush1.bf16.msra.mxu0 0
    %176 = vmatprep.subr.bf16.mxu0 0
    %177 = vmatpush1.bf16.msra.mxu0 0
    %178 = vmatprep.subr.bf16.mxu0 0
    %179 = vmatpush1.bf16.msra.mxu0 0
    %180 = vmatprep.subr.bf16.mxu0 0
    %181 = vmatpush1.bf16.msra.mxu0 0
    %182 = vmatprep.subr.bf16.mxu0 0
    %183 = vmatpush1.bf16.msra.mxu0 0
    %184 = vmatprep.subr.bf16.mxu0 0
    %185 = vmatpush1.bf16.msra.mxu0 0
    %186 = vmatprep.subr.bf16.mxu0 0
    %187 = vmatpush1.bf16.msra.mxu0 0
    %188 = vmatprep.mubr.bf16.mxu0 0
    %189 = vmatmul.mubr.bf16.gmra.mrb[0].mxu0 %v84
    %v190 = vpop.f32.mrb[0].mxu0
    %v191 = vadd.f32 %v106, %v190
    %v192 = vpop.f32.mrb[0].mxu0
    %v193 = vpop.f32.mrb[0].mxu0
    %v194 = vadd.f32 %v106, %v193
    %v195 = vpop.f32.mrb[0].mxu0
    %196 = vdwg.mxu0
    %v197 = vmax.f32 %v191, 0.0
    %v198 = vmax.f32 %v194, 0.0
    %v199 = vpack.c.bf16 %v198, %v197
    %v200 = vld [vmem:[#allocation7] sm:$0xf]
    %v201 = vld [vmem:[#allocation7 + $0x4] sm:$0xf]
    %v202 = vld [vmem:[#allocation7 + $0x8] sm:$0xf]
    %v203 = vld [vmem:[#allocation7 + $0xc] sm:$0xf]
    %v204 = vld [vmem:[#allocation7 + $0x10] sm:$0xf]
    %v205 = vld [vmem:[#allocation7 + $0x14] sm:$0xf]
    %v206 = vld [vmem:[#allocation7 + $0x18] sm:$0xf]
    %v207 = vld [vmem:[#allocation7 + $0x1c] sm:$0xf]
    %v208 = vld [vmem:[#allocation7 + $0x20] sm:$0xf]
    %v209 = vld [vmem:[#allocation7 + $0x24] sm:$0xf]
    %v210 = vld [vmem:[#allocation7 + $0x28] sm:$0xf]
    %v211 = vld [vmem:[#allocation7 + $0x2c] sm:$0xf]
    %v212 = vld [vmem:[#allocation7 + $0x30] sm:$0xf]
    %v213 = vld [vmem:[#allocation7 + $0x34] sm:$0xf]
    %v214 = vld [vmem:[#allocation7 + $0x38] sm:$0xf]
    %v215 = vld [vmem:[#allocation7 + $0x3c] sm:$0xf]
    %v216 = vld [vmem:[%s4] sm:$0x1]
    %v218 = vlaneseq
    %v219 = vshrl.u32 %v218, 7
    %v220 = vsub.s32 0, %v219
    %v221 = vrot.slane %v216, %v220
    %v239 = vunpack.c.l.b16 %v200
    %v240 = vunpack.c.l.b16 %v201
    %v241 = vunpack.c.l.b16 %v202
    %v242 = vunpack.c.l.b16 %v203
    %v243 = vunpack.c.l.b16 %v204
    %v244 = vunpack.c.l.b16 %v205
    %v245 = vunpack.c.l.b16 %v206
    %v246 = vunpack.c.l.b16 %v207
    %v247 = vunpack.c.l.b16 %v208
    %v248 = vunpack.c.l.b16 %v209
    %v249 = vunpack.c.l.b16 %v210
    %v250 = vunpack.c.l.b16 %v211
    %v251 = vunpack.c.l.b16 %v212
    %v252 = vunpack.c.l.b16 %v213
    %v253 = vunpack.c.l.b16 %v214
    %v254 = vunpack.c.l.b16 %v215
    %v255 = vpack.c.b16 %v240, %v239
    %v256 = vpack.c.b16 %v242, %v241
    %v257 = vpack.c.b16 %v244, %v243
    %v258 = vpack.c.b16 %v246, %v245
    %v259 = vpack.c.b16 %v248, %v247
    %v260 = vpack.c.b16 %v250, %v249
    %v261 = vpack.c.b16 %v252, %v251
    %v262 = vpack.c.b16 %v254, %v253
    %271 = vmatprep.subr.bf16.mxu0 0
    %272 = vmatpush1.bf16.msra.mxu0 %v255
    %273 = vmatprep.subr.bf16.mxu0 0
    %274 = vmatpush1.bf16.msra.mxu0 %v256
    %275 = vmatprep.subr.bf16.mxu0 0
    %276 = vmatpush1.bf16.msra.mxu0 %v257
    %277 = vmatprep.subr.bf16.mxu0 0
    %278 = vmatpush1.bf16.msra.mxu0 %v258
    %279 = vmatprep.subr.bf16.mxu0 0
    %280 = vmatpush1.bf16.msra.mxu0 %v259
    %281 = vmatprep.subr.bf16.mxu0 0
    %282 = vmatpush1.bf16.msra.mxu0 %v260
    %283 = vmatprep.subr.bf16.mxu0 0
    %284 = vmatpush1.bf16.msra.mxu0 %v261
    %285 = vmatprep.subr.bf16.mxu0 0
    %286 = vmatpush1.bf16.msra.mxu0 %v262
    %287 = vmatprep.subr.bf16.mxu0 0
    %288 = vmatpush1.bf16.msra.mxu0 0
    %289 = vmatprep.subr.bf16.mxu0 0
    %290 = vmatpush1.bf16.msra.mxu0 0
    %291 = vmatprep.subr.bf16.mxu0 0
    %292 = vmatpush1.bf16.msra.mxu0 0
    %293 = vmatprep.subr.bf16.mxu0 0
    %294 = vmatpush1.bf16.msra.mxu0 0
    %295 = vmatprep.subr.bf16.mxu0 0
    %296 = vmatpush1.bf16.msra.mxu0 0
    %297 = vmatprep.subr.bf16.mxu0 0
    %298 = vmatpush1.bf16.msra.mxu0 0
    %299 = vmatprep.subr.bf16.mxu0 0
    %300 = vmatpush1.bf16.msra.mxu0 0
    %301 = vmatprep.subr.bf16.mxu0 0
    %302 = vmatpush1.bf16.msra.mxu0 0
    %303 = vmatprep.mubr.bf16.mxu0 0
    %304 = vmatmul.mubr.bf16.gmra.mrb[0].mxu0 %v199
    %v305 = vpop.f32.mrb[0].mxu0
    %v306 = vadd.f32 %v221, %v305
    %v307 = vpop.f32.mrb[0].mxu0
    %v308 = vpop.f32.mrb[0].mxu0
    %v309 = vadd.f32 %v221, %v308
    %v310 = vpop.f32.mrb[0].mxu0
    %311 = vdwg.mxu0
    %v312 = vpack.c.bf16 %v81, %v80
    %v313 = vld [vmem:[#allocation8] sm:$0xf]
    %v314 = vld [vmem:[#allocation8 + $0x4] sm:$0xf]
    %v315 = vld [vmem:[#allocation8 + $0x8] sm:$0xf]
    %v316 = vld [vmem:[#allocation8 + $0xc] sm:$0xf]
    %v317 = vld [vmem:[#allocation8 + $0x10] sm:$0xf]
    %v318 = vld [vmem:[#allocation8 + $0x14] sm:$0xf]
    %v319 = vld [vmem:[#allocation8 + $0x18] sm:$0xf]
    %v320 = vld [vmem:[#allocation8 + $0x1c] sm:$0xf]
    %v321 = vld [vmem:[#allocation8 + $0x20] sm:$0xf]
    %v322 = vld [vmem:[#allocation8 + $0x24] sm:$0xf]
    %v323 = vld [vmem:[#allocation8 + $0x28] sm:$0xf]
    %v324 = vld [vmem:[#allocation8 + $0x2c] sm:$0xf]
    %v325 = vld [vmem:[#allocation8 + $0x30] sm:$0xf]
    %v326 = vld [vmem:[#allocation8 + $0x34] sm:$0xf]
    %v327 = vld [vmem:[#allocation8 + $0x38] sm:$0xf]
    %v328 = vld [vmem:[#allocation8 + $0x3c] sm:$0xf]
    %v345 = vunpack.c.l.b16 %v313
    %v346 = vunpack.c.l.b16 %v314
    %v347 = vunpack.c.l.b16 %v315
    %v348 = vunpack.c.l.b16 %v316
    %v349 = vunpack.c.l.b16 %v317
    %v350 = vunpack.c.l.b16 %v318
    %v351 = vunpack.c.l.b16 %v319
    %v352 = vunpack.c.l.b16 %v320
    %v353 = vunpack.c.l.b16 %v321
    %v354 = vunpack.c.l.b16 %v322
    %v355 = vunpack.c.l.b16 %v323
    %v356 = vunpack.c.l.b16 %v324
    %v357 = vunpack.c.l.b16 %v325
    %v358 = vunpack.c.l.b16 %v326
    %v359 = vunpack.c.l.b16 %v327
    %v360 = vunpack.c.l.b16 %v328
    %v361 = vpack.c.b16 %v346, %v345
    %v362 = vpack.c.b16 %v348, %v347
    %v363 = vpack.c.b16 %v350, %v349
    %v364 = vpack.c.b16 %v352, %v351
    %v365 = vpack.c.b16 %v354, %v353
    %v366 = vpack.c.b16 %v356, %v355
    %v367 = vpack.c.b16 %v358, %v357
    %v368 = vpack.c.b16 %v360, %v359
    %377 = vmatprep.subr.bf16.mxu0 0
    %378 = vmatpush1.bf16.msra.mxu0 %v361
    %379 = vmatprep.subr.bf16.mxu0 0
    %380 = vmatpush1.bf16.msra.mxu0 %v362
    %381 = vmatprep.subr.bf16.mxu0 0
    %382 = vmatpush1.bf16.msra.mxu0 %v363
    %383 = vmatprep.subr.bf16.mxu0 0
    %384 = vmatpush1.bf16.msra.mxu0 %v364
    %385 = vmatprep.subr.bf16.mxu0 0
    %386 = vmatpush1.bf16.msra.mxu0 %v365
    %387 = vmatprep.subr.bf16.mxu0 0
    %388 = vmatpush1.bf16.msra.mxu0 %v366
    %389 = vmatprep.subr.bf16.mxu0 0
    %390 = vmatpush1.bf16.msra.mxu0 %v367
    %391 = vmatprep.subr.bf16.mxu0 0
    %392 = vmatpush1.bf16.msra.mxu0 %v368
    %393 = vmatprep.subr.bf16.mxu0 0
    %394 = vmatpush1.bf16.msra.mxu0 0
    %395 = vmatprep.subr.bf16.mxu0 0
    %396 = vmatpush1.bf16.msra.mxu0 0
    %397 = vmatprep.subr.bf16.mxu0 0
    %398 = vmatpush1.bf16.msra.mxu0 0
    %399 = vmatprep.subr.bf16.mxu0 0
    %400 = vmatpush1.bf16.msra.mxu0 0
    %401 = vmatprep.subr.bf16.mxu0 0
    %402 = vmatpush1.bf16.msra.mxu0 0
    %403 = vmatprep.subr.bf16.mxu0 0
    %404 = vmatpush1.bf16.msra.mxu0 0
    %405 = vmatprep.subr.bf16.mxu0 0
    %406 = vmatpush1.bf16.msra.mxu0 0
    %407 = vmatprep.subr.bf16.mxu0 0
    %408 = vmatpush1.bf16.msra.mxu0 0
    %409 = vmatprep.mubr.bf16.mxu0 0
    %410 = vmatmul.mubr.bf16.gmra.mrb[0].mxu0 %v312
    %v411 = vpop.f32.mrb[0].mxu0
    %v412 = vadd.f32 %v306, %v411
    %v413 = vpop.f32.mrb[0].mxu0
    %v414 = vpop.f32.mrb[0].mxu0
    %v415 = vadd.f32 %v309, %v414
    %v416 = vpop.f32.mrb[0].mxu0
    %417 = vdwg.mxu0
    %418 = vst [vmem:[#allocation10] sm:$0xff] %v412
    %419 = vst [vmem:[#allocation10 + $0x8] sm:$0xff] %v415
    // Predicated region
    $region42: #{tpu_custom_call.1} parent=1 // pred_check
      _
    $region43: #{tpu_custom_call.1} parent=1 // pred_check_branch
      %421 = sbr.rel (0) target = $region45
    $region44: #{tpu_custom_call.1} parent=1 // pred_region
      %s423 = ssub.s32 256, 256
      %424 = vsyncadd [#allocation4], %s423
      %s425 = sshll.u32 [#allocation10], 4
      %s426 = int_to_ptr.vmem [resolvable:$true] %s425
      %431 = dma.vmem_to_hbm [thread:$0]  %s426, 256, %s6, [#allocation4], 128, 128, 8
    $region45: #{tpu_custom_call.1} parent=1 // pred_fallthru
      _
    // Predicated region
    $region46: #{tpu_custom_call.1} parent=1 // pred_check
      _
    $region47: #{tpu_custom_call.1} parent=1 // pred_check_branch
      %433 = sbr.rel (0) target = $region49
    $region48: #{tpu_custom_call.1} parent=1 // pred_region
      %434 = dma.done [#allocation4], 256
    $region49: #{tpu_custom_call.1} parent=1 // pred_fallthru
      _
    %435 = vsyncpa [#allocation3], 1
    %436 = vsyncpa [#allocation6], 1
    %437 = vsyncpa [#allocation9], 1
    %438 = vsyncpa [#allocation4], 1

</llo_original>
